<compile_context>
chip_gen: v5e
topology: v5e:2x2
jax: 0.10.0
libtpu: 0.0.40
codegen_flags: <defaults>
</compile_context>

<pallas_src>
import functools

import jax
import jax.numpy as jnp
from jax.experimental import pallas as pl
from jax.experimental.pallas import tpu as pltpu


def _axial_dw_kernel(x_ref, tab_ref, o_ref, *, W, HW, h_offs, w_offs):
    """One (block_rows, HWp) slab; each sublane row is one (n, c) image plane.

    tab_ref columns: [center, wh taps (h_offs order), ww taps (w_offs order), bias].
    """
    x_nat = x_ref[...]                                   # (R, HWp), input dtype
    xf = x_nat.astype(jnp.float32)
    _, HWp = x_nat.shape
    tab = tab_ref[...]                                   # (R, K) f32 packed table

    # Residual + zero-offset taps of both convs (folded into 'center' by wrapper).
    acc = xf * tab[:, 0:1]

    zero = jnp.zeros((), x_nat.dtype)
    if h_offs or w_offs:
        lane = jax.lax.broadcasted_iota(jnp.int32, (1, HWp), 1)  # flat spatial idx
    if w_offs:
        col = lane % W                                           # column within row

    c = 1
    # Depthwise conv along H: shifting by d rows == d*W lanes in the flat layout.
    for d in h_offs:
        shift = (-d * W) % HWp
        rolled = pltpu.roll(x_nat, shift, axis=1) if shift else x_nat
        valid = (lane + d * W >= 0) & (lane + d * W < HW)
        masked = jnp.where(valid, rolled, zero)
        acc = acc + masked.astype(jnp.float32) * tab[:, c:c + 1]
        c += 1
    # Depthwise conv along W: shift by d lanes, masked at image-row boundaries.
    for d in w_offs:
        shift = (-d) % HWp
        rolled = pltpu.roll(x_nat, shift, axis=1) if shift else x_nat
        valid = (col + d >= 0) & (col + d < W)
        masked = jnp.where(valid, rolled, zero)
        acc = acc + masked.astype(jnp.float32) * tab[:, c:c + 1]
        c += 1

    acc = acc + tab[:, c:c + 1]                          # combined bias (bh + bw)
    o_ref[...] = acc.astype(o_ref.dtype)


def _ceil_div(a, b):
    return -(-a // b)


def _choose_block_rows(nc, hwp, itemsize, target_bytes=4 * 1024 * 1024,
                       max_rows=4096):
    """Rows per block: whole slab if small, else a dtype-aligned ~target-sized tile."""
    row_align = max(8, 8 * (4 // max(1, itemsize)))      # 8 f32, 16 bf16, 32 int8/fp8
    bytes_per_row = hwp * itemsize
    if nc <= row_align or nc * bytes_per_row <= target_bytes:
        return int(nc)                                   # single full block
    rows = (target_bytes // bytes_per_row) // row_align * row_align
    rows = int(max(row_align, min(rows, max_rows, nc)))
    # Prefer an even number of grid steps (v7x: two TensorCores share the grid).
    nb = _ceil_div(nc, rows)
    if nb > 1 and nb % 2 == 1:
        rows_alt = _ceil_div(_ceil_div(nc, nb + 1), row_align) * row_align
        if row_align <= rows_alt <= rows:
            rows = int(rows_alt)
    return rows


def axial_dw(x, wh, bh, ww, bw, *, dilation=1, block_rows=None,
             target_block_bytes=4 * 1024 * 1024):
    """x: (N, C, H, W); wh: (C, kh); bh: (C, 1); ww: (C, kw); bw: (C, 1)."""
    N, C, H, W = x.shape
    kh = wh.shape[-1]
    kw = ww.shape[-1]
    HW = H * W
    HWp = _ceil_div(HW, 128) * 128                       # lane-pad to multiple of 128
    NC = N * C

    # PyTorch padding='same' (stride 1): low-side pad = total // 2.
    pad_h = (dilation * (kh - 1)) // 2
    pad_w = (dilation * (kw - 1)) // 2
    h_taps = [(k, k * dilation - pad_h) for k in range(kh)]   # offset in rows
    w_taps = [(k, k * dilation - pad_w) for k in range(kw)]   # offset in cols
    h_nz = [(k, d) for k, d in h_taps if d != 0 and abs(d) < H]
    w_nz = [(k, d) for k, d in w_taps if d != 0 and abs(d) < W]

    wh32 = wh.reshape(C, kh).astype(jnp.float32)
    ww32 = ww.reshape(C, kw).astype(jnp.float32)
    bias = (bh.reshape(C) + bw.reshape(C)).astype(jnp.float32)

    # center = 1 (residual) + zero-offset taps of both convs.
    center = jnp.ones((C,), jnp.float32)
    for k, d in h_taps:
        if d == 0:
            center = center + wh32[:, k]
    for k, d in w_taps:
        if d == 0:
            center = center + ww32[:, k]

    cols = [center[:, None]]
    cols += [wh32[:, k:k + 1] for k, _ in h_nz]
    cols += [ww32[:, k:k + 1] for k, _ in w_nz]
    cols += [bias[:, None]]
    tab_c = jnp.concatenate(cols, axis=1)                # (C, K_TOT)
    tab = jnp.tile(tab_c, (N, 1))                        # (NC, K_TOT), row = n*C + c
    K_TOT = tab.shape[1]

    # Lane-dense layout: row r of the 2-D slab is the (n, c) image plane.
    x2 = x.reshape(NC, HW)
    if HWp != HW:
        x2 = jnp.pad(x2, ((0, 0), (0, HWp - HW)))

    if block_rows is None:
        block_rows = _choose_block_rows(NC, HWp, x.dtype.itemsize,
                                        target_block_bytes)
    grid = (pl.cdiv(NC, block_rows),)                    # halo-free row tiling

    kernel = functools.partial(_axial_dw_kernel, W=W, HW=HW,
                               h_offs=tuple(d for _, d in h_nz),
                               w_offs=tuple(d for _, d in w_nz))
    out2 = pl.pallas_call(
        kernel,
        out_shape=jax.ShapeDtypeStruct((NC, HWp), x.dtype),
        grid_spec=pltpu.PrefetchScalarGridSpec(
            num_scalar_prefetch=0,
            grid=grid,
            in_specs=[
                pl.BlockSpec((block_rows, HWp), lambda r: (r, 0)),
                pl.BlockSpec((block_rows, K_TOT), lambda r: (r, 0)),
            ],
            out_specs=pl.BlockSpec((block_rows, HWp), lambda r: (r, 0)),
        ),
        compiler_params=pltpu.CompilerParams(
            dimension_semantics=("parallel",),
            vmem_limit_bytes=48 * 1024 * 1024,
        ),
    )(x2, tab)

    if HWp != HW:
        out2 = out2[:, :HW]
    return out2.reshape(N, C, H, W)


def _reference(x, wh, bh, ww, bw, dilation=1):
    """Pure-JAX reference (depthwise convs, PyTorch-style 'same' padding)."""
    C = x.shape[1]
    kh, kw = wh.shape[-1], ww.shape[-1]
    w_h = wh.reshape(C, 1, kh, 1)   # OIHW, groups=C -> I/group = 1
    w_w = ww.reshape(C, 1, 1, kw)
    tot_h = dilation * (kh - 1)
    tot_w = dilation * (kw - 1)
    lo_h, lo_w = tot_h // 2, tot_w // 2
    yh = jax.lax.conv_general_dilated(
        x, w_h, window_strides=(1, 1),
        padding=((lo_h, tot_h - lo_h), (0, 0)),
        rhs_dilation=(dilation, dilation),
        dimension_numbers=("NCHW", "OIHW", "NCHW"),
        feature_group_count=C) + bh.reshape(1, C, 1, 1)
    yw = jax.lax.conv_general_dilated(
        x, w_w, window_strides=(1, 1),
        padding=((0, 0), (lo_w, tot_w - lo_w)),
        rhs_dilation=(dilation, dilation),
        dimension_numbers=("NCHW", "OIHW", "NCHW"),
        feature_group_count=C) + bw.reshape(1, C, 1, 1)
    return x + yh + yw


if __name__ == "__main__":
    key = jax.random.PRNGKey(0)
    ks = jax.random.split(key, 10)

    # Config 1 — matches the module example: dim=4, mixer_kernel=(7, 7), dilation=1.
    N, C, H, W = 2, 4, 16, 16
    KH, KW = 7, 7
    x = jax.random.normal(ks[0], (N, C, H, W), dtype=jnp.float32)
    wh = jax.random.normal(ks[1], (C, KH), dtype=jnp.float32) * 0.1
    bh = jax.random.normal(ks[2], (C, 1), dtype=jnp.float32) * 0.1
    ww = jax.random.normal(ks[3], (C, KW), dtype=jnp.float32) * 0.1
    bw = jax.random.normal(ks[4], (C, 1), dtype=jnp.float32) * 0.1

    out = jax.block_until_ready(axial_dw(x, wh, bh, ww, bw, dilation=1))
    ref = _reference(x, wh, bh, ww, bw, dilation=1)
    assert out.shape == (N, C, H, W)
    assert jnp.allclose(out, ref, atol=1e-5, rtol=1e-5)

    # Config 2 — exercises H*W not a multiple of 128 (lane padding), an even
    # kernel size, and dilation > 1 (previously untested paths).
    N2, C2, H2, W2 = 2, 3, 12, 12
    KH2, KW2, DIL2 = 4, 5, 2
    x2 = jax.random.normal(ks[5], (N2, C2, H2, W2), dtype=jnp.float32)
    wh2 = jax.random.normal(ks[6], (C2, KH2), dtype=jnp.float32) * 0.1
    bh2 = jax.random.normal(ks[7], (C2, 1), dtype=jnp.float32) * 0.1
    ww2 = jax.random.normal(ks[8], (C2, KW2), dtype=jnp.float32) * 0.1
    bw2 = jax.random.normal(ks[9], (C2, 1), dtype=jnp.float32) * 0.1

    out2 = jax.block_until_ready(axial_dw(x2, wh2, bh2, ww2, bw2, dilation=DIL2))
    ref2 = _reference(x2, wh2, bh2, ww2, bw2, dilation=DIL2)
    assert out2.shape == (N2, C2, H2, W2)
    assert jnp.allclose(out2, ref2, atol=1e-5, rtol=1e-5)

    print("KERNEL_OK")
</pallas_src>

<mosaic_0001>
module attributes {stable_mosaic.version = 11 : i64} {
  func.func @_axial_dw_kernel(%arg0: i32, %arg1: memref<8x256xf32, #tpu.memory_space<vmem>>, %arg2: memref<8x14xf32, #tpu.memory_space<vmem>>, %arg3: memref<8x256xf32, #tpu.memory_space<vmem>>) attributes {dimension_semantics = [#tpu.dimension_semantics<parallel>], iteration_bounds = array<i64: 1>, scalar_prefetch = 0 : i64, scratch_operands = 0 : i64, tpu.core_type = #tpu.core_type<tc>, window_params = [{transform_indices = @transform_0, window_bounds = array<i64: 8, 256>}, {transform_indices = @transform_1, window_bounds = array<i64: 8, 14>}, {transform_indices = @transform_2, window_bounds = array<i64: 8, 256>}]} {
    %c0 = arith.constant 0 : index
    %c0_0 = arith.constant 0 : index
    %0 = vector.load %arg1[%c0, %c0_0] : memref<8x256xf32, #tpu.memory_space<vmem>>, vector<8x256xf32>
    %c0_1 = arith.constant 0 : index
    %c0_2 = arith.constant 0 : index
    %1 = vector.load %arg2[%c0_1, %c0_2] : memref<8x14xf32, #tpu.memory_space<vmem>>, vector<8x14xf32>
    %2 = vector.extract_strided_slice %1 {offsets = [0, 0], sizes = [8, 1], strides = [1, 1]} : vector<8x14xf32> to vector<8x1xf32>
    %3 = vector.broadcast %2 : vector<8x1xf32> to vector<8x256xf32>
    %4 = arith.mulf %0, %3 : vector<8x256xf32>
    %5 = tpu.iota {dimensions = array<i32: 1>} : vector<1x256xi32>
    %c16_i32 = arith.constant 16 : i32
    %c0_i32 = arith.constant 0 : i32
    %6 = arith.cmpi eq, %c16_i32, %c0_i32 : i32
    %c1_i32 = arith.constant 1 : i32
    %7 = arith.select %6, %c1_i32, %c16_i32 : i32
    %8 = vector.broadcast %7 : i32 to vector<1x256xi32>
    %9 = arith.remsi %5, %8 : vector<1x256xi32>
    %c0_i32_3 = arith.constant 0 : i32
    %10 = vector.broadcast %c0_i32_3 : i32 to vector<1x256xi32>
    %11 = arith.cmpi ne, %9, %10 : vector<1x256xi32>
    %c0_i32_4 = arith.constant 0 : i32
    %12 = vector.broadcast %c0_i32_4 : i32 to vector<1x256xi32>
    %13 = arith.cmpi slt, %9, %12 : vector<1x256xi32>
    %c0_i32_5 = arith.constant 0 : i32
    %14 = arith.cmpi slt, %7, %c0_i32_5 : i32
    %15 = vector.broadcast %14 : i1 to vector<1x256xi1>
    %16 = vector.broadcast %15 : vector<1x256xi1> to vector<1x256xi1>
    %17 = arith.xori %13, %16 : vector<1x256xi1>
    %18 = arith.andi %17, %11 : vector<1x256xi1>
    %19 = vector.broadcast %7 : i32 to vector<1x256xi32>
    %20 = arith.addi %9, %19 : vector<1x256xi32>
    %21 = arith.select %18, %20, %9 : vector<1x256xi1>, vector<1x256xi32>
    %c48_i32 = arith.constant 48 : i32
    %22 = tpu.dynamic_rotate %0 by %c48_i32 dim 1 : vector<8x256xf32>, i32 -> vector<8x256xf32>
    %c-48_i32 = arith.constant -48 : i32
    %23 = vector.broadcast %c-48_i32 : i32 to vector<1x256xi32>
    %24 = arith.addi %5, %23 : vector<1x256xi32>
    %c0_i32_6 = arith.constant 0 : i32
    %25 = vector.broadcast %c0_i32_6 : i32 to vector<1x256xi32>
    %26 = arith.cmpi sge, %24, %25 : vector<1x256xi32>
    %c-48_i32_7 = arith.constant -48 : i32
    %27 = vector.broadcast %c-48_i32_7 : i32 to vector<1x256xi32>
    %28 = arith.addi %5, %27 : vector<1x256xi32>
    %c256_i32 = arith.constant 256 : i32
    %29 = vector.broadcast %c256_i32 : i32 to vector<1x256xi32>
    %30 = arith.cmpi slt, %28, %29 : vector<1x256xi32>
    %31 = arith.andi %26, %30 : vector<1x256xi1>
    %cst = arith.constant 0.000000e+00 : f32
    %32 = vector.shape_cast %31 : vector<1x256xi1> to vector<1x256xi1>
    %33 = vector.broadcast %32 : vector<1x256xi1> to vector<8x256xi1>
    %34 = vector.broadcast %cst : f32 to vector<8x256xf32>
    %35 = arith.select %33, %22, %34 : vector<8x256xi1>, vector<8x256xf32>
    %36 = vector.extract_strided_slice %1 {offsets = [0, 1], sizes = [8, 1], strides = [1, 1]} : vector<8x14xf32> to vector<8x1xf32>
    %37 = vector.broadcast %36 : vector<8x1xf32> to vector<8x256xf32>
    %38 = arith.mulf %35, %37 : vector<8x256xf32>
    %39 = arith.addf %4, %38 : vector<8x256xf32>
    %c32_i32 = arith.constant 32 : i32
    %40 = tpu.dynamic_rotate %0 by %c32_i32 dim 1 : vector<8x256xf32>, i32 -> vector<8x256xf32>
    %c-32_i32 = arith.constant -32 : i32
    %41 = vector.broadcast %c-32_i32 : i32 to vector<1x256xi32>
    %42 = arith.addi %5, %41 : vector<1x256xi32>
    %c0_i32_8 = arith.constant 0 : i32
    %43 = vector.broadcast %c0_i32_8 : i32 to vector<1x256xi32>
    %44 = arith.cmpi sge, %42, %43 : vector<1x256xi32>
    %c-32_i32_9 = arith.constant -32 : i32
    %45 = vector.broadcast %c-32_i32_9 : i32 to vector<1x256xi32>
    %46 = arith.addi %5, %45 : vector<1x256xi32>
    %c256_i32_10 = arith.constant 256 : i32
    %47 = vector.broadcast %c256_i32_10 : i32 to vector<1x256xi32>
    %48 = arith.cmpi slt, %46, %47 : vector<1x256xi32>
    %49 = arith.andi %44, %48 : vector<1x256xi1>
    %cst_11 = arith.constant 0.000000e+00 : f32
    %50 = vector.shape_cast %49 : vector<1x256xi1> to vector<1x256xi1>
    %51 = vector.broadcast %50 : vector<1x256xi1> to vector<8x256xi1>
    %52 = vector.broadcast %cst_11 : f32 to vector<8x256xf32>
    %53 = arith.select %51, %40, %52 : vector<8x256xi1>, vector<8x256xf32>
    %54 = vector.extract_strided_slice %1 {offsets = [0, 2], sizes = [8, 1], strides = [1, 1]} : vector<8x14xf32> to vector<8x1xf32>
    %55 = vector.broadcast %54 : vector<8x1xf32> to vector<8x256xf32>
    %56 = arith.mulf %53, %55 : vector<8x256xf32>
    %57 = arith.addf %39, %56 : vector<8x256xf32>
    %c16_i32_12 = arith.constant 16 : i32
    %58 = tpu.dynamic_rotate %0 by %c16_i32_12 dim 1 : vector<8x256xf32>, i32 -> vector<8x256xf32>
    %c-16_i32 = arith.constant -16 : i32
    %59 = vector.broadcast %c-16_i32 : i32 to vector<1x256xi32>
    %60 = arith.addi %5, %59 : vector<1x256xi32>
    %c0_i32_13 = arith.constant 0 : i32
    %61 = vector.broadcast %c0_i32_13 : i32 to vector<1x256xi32>
    %62 = arith.cmpi sge, %60, %61 : vector<1x256xi32>
    %c-16_i32_14 = arith.constant -16 : i32
    %63 = vector.broadcast %c-16_i32_14 : i32 to vector<1x256xi32>
    %64 = arith.addi %5, %63 : vector<1x256xi32>
    %c256_i32_15 = arith.constant 256 : i32
    %65 = vector.broadcast %c256_i32_15 : i32 to vector<1x256xi32>
    %66 = arith.cmpi slt, %64, %65 : vector<1x256xi32>
    %67 = arith.andi %62, %66 : vector<1x256xi1>
    %cst_16 = arith.constant 0.000000e+00 : f32
    %68 = vector.shape_cast %67 : vector<1x256xi1> to vector<1x256xi1>
    %69 = vector.broadcast %68 : vector<1x256xi1> to vector<8x256xi1>
    %70 = vector.broadcast %cst_16 : f32 to vector<8x256xf32>
    %71 = arith.select %69, %58, %70 : vector<8x256xi1>, vector<8x256xf32>
    %72 = vector.extract_strided_slice %1 {offsets = [0, 3], sizes = [8, 1], strides = [1, 1]} : vector<8x14xf32> to vector<8x1xf32>
    %73 = vector.broadcast %72 : vector<8x1xf32> to vector<8x256xf32>
    %74 = arith.mulf %71, %73 : vector<8x256xf32>
    %75 = arith.addf %57, %74 : vector<8x256xf32>
    %c240_i32 = arith.constant 240 : i32
    %76 = tpu.dynamic_rotate %0 by %c240_i32 dim 1 : vector<8x256xf32>, i32 -> vector<8x256xf32>
    %c16_i32_17 = arith.constant 16 : i32
    %77 = vector.broadcast %c16_i32_17 : i32 to vector<1x256xi32>
    %78 = arith.addi %5, %77 : vector<1x256xi32>
    %c0_i32_18 = arith.constant 0 : i32
    %79 = vector.broadcast %c0_i32_18 : i32 to vector<1x256xi32>
    %80 = arith.cmpi sge, %78, %79 : vector<1x256xi32>
    %c16_i32_19 = arith.constant 16 : i32
    %81 = vector.broadcast %c16_i32_19 : i32 to vector<1x256xi32>
    %82 = arith.addi %5, %81 : vector<1x256xi32>
    %c256_i32_20 = arith.constant 256 : i32
    %83 = vector.broadcast %c256_i32_20 : i32 to vector<1x256xi32>
    %84 = arith.cmpi slt, %82, %83 : vector<1x256xi32>
    %85 = arith.andi %80, %84 : vector<1x256xi1>
    %cst_21 = arith.constant 0.000000e+00 : f32
    %86 = vector.shape_cast %85 : vector<1x256xi1> to vector<1x256xi1>
    %87 = vector.broadcast %86 : vector<1x256xi1> to vector<8x256xi1>
    %88 = vector.broadcast %cst_21 : f32 to vector<8x256xf32>
    %89 = arith.select %87, %76, %88 : vector<8x256xi1>, vector<8x256xf32>
    %90 = vector.extract_strided_slice %1 {offsets = [0, 4], sizes = [8, 1], strides = [1, 1]} : vector<8x14xf32> to vector<8x1xf32>
    %91 = vector.broadcast %90 : vector<8x1xf32> to vector<8x256xf32>
    %92 = arith.mulf %89, %91 : vector<8x256xf32>
    %93 = arith.addf %75, %92 : vector<8x256xf32>
    %c224_i32 = arith.constant 224 : i32
    %94 = tpu.dynamic_rotate %0 by %c224_i32 dim 1 : vector<8x256xf32>, i32 -> vector<8x256xf32>
    %c32_i32_22 = arith.constant 32 : i32
    %95 = vector.broadcast %c32_i32_22 : i32 to vector<1x256xi32>
    %96 = arith.addi %5, %95 : vector<1x256xi32>
    %c0_i32_23 = arith.constant 0 : i32
    %97 = vector.broadcast %c0_i32_23 : i32 to vector<1x256xi32>
    %98 = arith.cmpi sge, %96, %97 : vector<1x256xi32>
    %c32_i32_24 = arith.constant 32 : i32
    %99 = vector.broadcast %c32_i32_24 : i32 to vector<1x256xi32>
    %100 = arith.addi %5, %99 : vector<1x256xi32>
    %c256_i32_25 = arith.constant 256 : i32
    %101 = vector.broadcast %c256_i32_25 : i32 to vector<1x256xi32>
    %102 = arith.cmpi slt, %100, %101 : vector<1x256xi32>
    %103 = arith.andi %98, %102 : vector<1x256xi1>
    %cst_26 = arith.constant 0.000000e+00 : f32
    %104 = vector.shape_cast %103 : vector<1x256xi1> to vector<1x256xi1>
    %105 = vector.broadcast %104 : vector<1x256xi1> to vector<8x256xi1>
    %106 = vector.broadcast %cst_26 : f32 to vector<8x256xf32>
    %107 = arith.select %105, %94, %106 : vector<8x256xi1>, vector<8x256xf32>
    %108 = vector.extract_strided_slice %1 {offsets = [0, 5], sizes = [8, 1], strides = [1, 1]} : vector<8x14xf32> to vector<8x1xf32>
    %109 = vector.broadcast %108 : vector<8x1xf32> to vector<8x256xf32>
    %110 = arith.mulf %107, %109 : vector<8x256xf32>
    %111 = arith.addf %93, %110 : vector<8x256xf32>
    %c208_i32 = arith.constant 208 : i32
    %112 = tpu.dynamic_rotate %0 by %c208_i32 dim 1 : vector<8x256xf32>, i32 -> vector<8x256xf32>
    %c48_i32_27 = arith.constant 48 : i32
    %113 = vector.broadcast %c48_i32_27 : i32 to vector<1x256xi32>
    %114 = arith.addi %5, %113 : vector<1x256xi32>
    %c0_i32_28 = arith.constant 0 : i32
    %115 = vector.broadcast %c0_i32_28 : i32 to vector<1x256xi32>
    %116 = arith.cmpi sge, %114, %115 : vector<1x256xi32>
    %c48_i32_29 = arith.constant 48 : i32
    %117 = vector.broadcast %c48_i32_29 : i32 to vector<1x256xi32>
    %118 = arith.addi %5, %117 : vector<1x256xi32>
    %c256_i32_30 = arith.constant 256 : i32
    %119 = vector.broadcast %c256_i32_30 : i32 to vector<1x256xi32>
    %120 = arith.cmpi slt, %118, %119 : vector<1x256xi32>
    %121 = arith.andi %116, %120 : vector<1x256xi1>
    %cst_31 = arith.constant 0.000000e+00 : f32
    %122 = vector.shape_cast %121 : vector<1x256xi1> to vector<1x256xi1>
    %123 = vector.broadcast %122 : vector<1x256xi1> to vector<8x256xi1>
    %124 = vector.broadcast %cst_31 : f32 to vector<8x256xf32>
    %125 = arith.select %123, %112, %124 : vector<8x256xi1>, vector<8x256xf32>
    %126 = vector.extract_strided_slice %1 {offsets = [0, 6], sizes = [8, 1], strides = [1, 1]} : vector<8x14xf32> to vector<8x1xf32>
    %127 = vector.broadcast %126 : vector<8x1xf32> to vector<8x256xf32>
    %128 = arith.mulf %125, %127 : vector<8x256xf32>
    %129 = arith.addf %111, %128 : vector<8x256xf32>
    %c3_i32 = arith.constant 3 : i32
    %130 = tpu.dynamic_rotate %0 by %c3_i32 dim 1 : vector<8x256xf32>, i32 -> vector<8x256xf32>
    %c-3_i32 = arith.constant -3 : i32
    %131 = vector.broadcast %c-3_i32 : i32 to vector<1x256xi32>
    %132 = arith.addi %21, %131 : vector<1x256xi32>
    %c0_i32_32 = arith.constant 0 : i32
    %133 = vector.broadcast %c0_i32_32 : i32 to vector<1x256xi32>
    %134 = arith.cmpi sge, %132, %133 : vector<1x256xi32>
    %c-3_i32_33 = arith.constant -3 : i32
    %135 = vector.broadcast %c-3_i32_33 : i32 to vector<1x256xi32>
    %136 = arith.addi %21, %135 : vector<1x256xi32>
    %c16_i32_34 = arith.constant 16 : i32
    %137 = vector.broadcast %c16_i32_34 : i32 to vector<1x256xi32>
    %138 = arith.cmpi slt, %136, %137 : vector<1x256xi32>
    %139 = arith.andi %134, %138 : vector<1x256xi1>
    %cst_35 = arith.constant 0.000000e+00 : f32
    %140 = vector.shape_cast %139 : vector<1x256xi1> to vector<1x256xi1>
    %141 = vector.broadcast %140 : vector<1x256xi1> to vector<8x256xi1>
    %142 = vector.broadcast %cst_35 : f32 to vector<8x256xf32>
    %143 = arith.select %141, %130, %142 : vector<8x256xi1>, vector<8x256xf32>
    %144 = vector.extract_strided_slice %1 {offsets = [0, 7], sizes = [8, 1], strides = [1, 1]} : vector<8x14xf32> to vector<8x1xf32>
    %145 = vector.broadcast %144 : vector<8x1xf32> to vector<8x256xf32>
    %146 = arith.mulf %143, %145 : vector<8x256xf32>
    %147 = arith.addf %129, %146 : vector<8x256xf32>
    %c2_i32 = arith.constant 2 : i32
    %148 = tpu.dynamic_rotate %0 by %c2_i32 dim 1 : vector<8x256xf32>, i32 -> vector<8x256xf32>
    %c-2_i32 = arith.constant -2 : i32
    %149 = vector.broadcast %c-2_i32 : i32 to vector<1x256xi32>
    %150 = arith.addi %21, %149 : vector<1x256xi32>
    %c0_i32_36 = arith.constant 0 : i32
    %151 = vector.broadcast %c0_i32_36 : i32 to vector<1x256xi32>
    %152 = arith.cmpi sge, %150, %151 : vector<1x256xi32>
    %c-2_i32_37 = arith.constant -2 : i32
    %153 = vector.broadcast %c-2_i32_37 : i32 to vector<1x256xi32>
    %154 = arith.addi %21, %153 : vector<1x256xi32>
    %c16_i32_38 = arith.constant 16 : i32
    %155 = vector.broadcast %c16_i32_38 : i32 to vector<1x256xi32>
    %156 = arith.cmpi slt, %154, %155 : vector<1x256xi32>
    %157 = arith.andi %152, %156 : vector<1x256xi1>
    %cst_39 = arith.constant 0.000000e+00 : f32
    %158 = vector.shape_cast %157 : vector<1x256xi1> to vector<1x256xi1>
    %159 = vector.broadcast %158 : vector<1x256xi1> to vector<8x256xi1>
    %160 = vector.broadcast %cst_39 : f32 to vector<8x256xf32>
    %161 = arith.select %159, %148, %160 : vector<8x256xi1>, vector<8x256xf32>
    %162 = vector.extract_strided_slice %1 {offsets = [0, 8], sizes = [8, 1], strides = [1, 1]} : vector<8x14xf32> to vector<8x1xf32>
    %163 = vector.broadcast %162 : vector<8x1xf32> to vector<8x256xf32>
    %164 = arith.mulf %161, %163 : vector<8x256xf32>
    %165 = arith.addf %147, %164 : vector<8x256xf32>
    %c1_i32_40 = arith.constant 1 : i32
    %166 = tpu.dynamic_rotate %0 by %c1_i32_40 dim 1 : vector<8x256xf32>, i32 -> vector<8x256xf32>
    %c-1_i32 = arith.constant -1 : i32
    %167 = vector.broadcast %c-1_i32 : i32 to vector<1x256xi32>
    %168 = arith.addi %21, %167 : vector<1x256xi32>
    %c0_i32_41 = arith.constant 0 : i32
    %169 = vector.broadcast %c0_i32_41 : i32 to vector<1x256xi32>
    %170 = arith.cmpi sge, %168, %169 : vector<1x256xi32>
    %c-1_i32_42 = arith.constant -1 : i32
    %171 = vector.broadcast %c-1_i32_42 : i32 to vector<1x256xi32>
    %172 = arith.addi %21, %171 : vector<1x256xi32>
    %c16_i32_43 = arith.constant 16 : i32
    %173 = vector.broadcast %c16_i32_43 : i32 to vector<1x256xi32>
    %174 = arith.cmpi slt, %172, %173 : vector<1x256xi32>
    %175 = arith.andi %170, %174 : vector<1x256xi1>
    %cst_44 = arith.constant 0.000000e+00 : f32
    %176 = vector.shape_cast %175 : vector<1x256xi1> to vector<1x256xi1>
    %177 = vector.broadcast %176 : vector<1x256xi1> to vector<8x256xi1>
    %178 = vector.broadcast %cst_44 : f32 to vector<8x256xf32>
    %179 = arith.select %177, %166, %178 : vector<8x256xi1>, vector<8x256xf32>
    %180 = vector.extract_strided_slice %1 {offsets = [0, 9], sizes = [8, 1], strides = [1, 1]} : vector<8x14xf32> to vector<8x1xf32>
    %181 = vector.broadcast %180 : vector<8x1xf32> to vector<8x256xf32>
    %182 = arith.mulf %179, %181 : vector<8x256xf32>
    %183 = arith.addf %165, %182 : vector<8x256xf32>
    %c255_i32 = arith.constant 255 : i32
    %184 = tpu.dynamic_rotate %0 by %c255_i32 dim 1 : vector<8x256xf32>, i32 -> vector<8x256xf32>
    %c1_i32_45 = arith.constant 1 : i32
    %185 = vector.broadcast %c1_i32_45 : i32 to vector<1x256xi32>
    %186 = arith.addi %21, %185 : vector<1x256xi32>
    %c0_i32_46 = arith.constant 0 : i32
    %187 = vector.broadcast %c0_i32_46 : i32 to vector<1x256xi32>
    %188 = arith.cmpi sge, %186, %187 : vector<1x256xi32>
    %c1_i32_47 = arith.constant 1 : i32
    %189 = vector.broadcast %c1_i32_47 : i32 to vector<1x256xi32>
    %190 = arith.addi %21, %189 : vector<1x256xi32>
    %c16_i32_48 = arith.constant 16 : i32
    %191 = vector.broadcast %c16_i32_48 : i32 to vector<1x256xi32>
    %192 = arith.cmpi slt, %190, %191 : vector<1x256xi32>
    %193 = arith.andi %188, %192 : vector<1x256xi1>
    %cst_49 = arith.constant 0.000000e+00 : f32
    %194 = vector.shape_cast %193 : vector<1x256xi1> to vector<1x256xi1>
    %195 = vector.broadcast %194 : vector<1x256xi1> to vector<8x256xi1>
    %196 = vector.broadcast %cst_49 : f32 to vector<8x256xf32>
    %197 = arith.select %195, %184, %196 : vector<8x256xi1>, vector<8x256xf32>
    %198 = vector.extract_strided_slice %1 {offsets = [0, 10], sizes = [8, 1], strides = [1, 1]} : vector<8x14xf32> to vector<8x1xf32>
    %199 = vector.broadcast %198 : vector<8x1xf32> to vector<8x256xf32>
    %200 = arith.mulf %197, %199 : vector<8x256xf32>
    %201 = arith.addf %183, %200 : vector<8x256xf32>
    %c254_i32 = arith.constant 254 : i32
    %202 = tpu.dynamic_rotate %0 by %c254_i32 dim 1 : vector<8x256xf32>, i32 -> vector<8x256xf32>
    %c2_i32_50 = arith.constant 2 : i32
    %203 = vector.broadcast %c2_i32_50 : i32 to vector<1x256xi32>
    %204 = arith.addi %21, %203 : vector<1x256xi32>
    %c0_i32_51 = arith.constant 0 : i32
    %205 = vector.broadcast %c0_i32_51 : i32 to vector<1x256xi32>
    %206 = arith.cmpi sge, %204, %205 : vector<1x256xi32>
    %c2_i32_52 = arith.constant 2 : i32
    %207 = vector.broadcast %c2_i32_52 : i32 to vector<1x256xi32>
    %208 = arith.addi %21, %207 : vector<1x256xi32>
    %c16_i32_53 = arith.constant 16 : i32
    %209 = vector.broadcast %c16_i32_53 : i32 to vector<1x256xi32>
    %210 = arith.cmpi slt, %208, %209 : vector<1x256xi32>
    %211 = arith.andi %206, %210 : vector<1x256xi1>
    %cst_54 = arith.constant 0.000000e+00 : f32
    %212 = vector.shape_cast %211 : vector<1x256xi1> to vector<1x256xi1>
    %213 = vector.broadcast %212 : vector<1x256xi1> to vector<8x256xi1>
    %214 = vector.broadcast %cst_54 : f32 to vector<8x256xf32>
    %215 = arith.select %213, %202, %214 : vector<8x256xi1>, vector<8x256xf32>
    %216 = vector.extract_strided_slice %1 {offsets = [0, 11], sizes = [8, 1], strides = [1, 1]} : vector<8x14xf32> to vector<8x1xf32>
    %217 = vector.broadcast %216 : vector<8x1xf32> to vector<8x256xf32>
    %218 = arith.mulf %215, %217 : vector<8x256xf32>
    %219 = arith.addf %201, %218 : vector<8x256xf32>
    %c253_i32 = arith.constant 253 : i32
    %220 = tpu.dynamic_rotate %0 by %c253_i32 dim 1 : vector<8x256xf32>, i32 -> vector<8x256xf32>
    %c3_i32_55 = arith.constant 3 : i32
    %221 = vector.broadcast %c3_i32_55 : i32 to vector<1x256xi32>
    %222 = arith.addi %21, %221 : vector<1x256xi32>
    %c0_i32_56 = arith.constant 0 : i32
    %223 = vector.broadcast %c0_i32_56 : i32 to vector<1x256xi32>
    %224 = arith.cmpi sge, %222, %223 : vector<1x256xi32>
    %c3_i32_57 = arith.constant 3 : i32
    %225 = vector.broadcast %c3_i32_57 : i32 to vector<1x256xi32>
    %226 = arith.addi %21, %225 : vector<1x256xi32>
    %c16_i32_58 = arith.constant 16 : i32
    %227 = vector.broadcast %c16_i32_58 : i32 to vector<1x256xi32>
    %228 = arith.cmpi slt, %226, %227 : vector<1x256xi32>
    %229 = arith.andi %224, %228 : vector<1x256xi1>
    %cst_59 = arith.constant 0.000000e+00 : f32
    %230 = vector.shape_cast %229 : vector<1x256xi1> to vector<1x256xi1>
    %231 = vector.broadcast %230 : vector<1x256xi1> to vector<8x256xi1>
    %232 = vector.broadcast %cst_59 : f32 to vector<8x256xf32>
    %233 = arith.select %231, %220, %232 : vector<8x256xi1>, vector<8x256xf32>
    %234 = vector.extract_strided_slice %1 {offsets = [0, 12], sizes = [8, 1], strides = [1, 1]} : vector<8x14xf32> to vector<8x1xf32>
    %235 = vector.broadcast %234 : vector<8x1xf32> to vector<8x256xf32>
    %236 = arith.mulf %233, %235 : vector<8x256xf32>
    %237 = arith.addf %219, %236 : vector<8x256xf32>
    %238 = vector.extract_strided_slice %1 {offsets = [0, 13], sizes = [8, 1], strides = [1, 1]} : vector<8x14xf32> to vector<8x1xf32>
    %239 = vector.broadcast %238 : vector<8x1xf32> to vector<8x256xf32>
    %240 = arith.addf %237, %239 : vector<8x256xf32>
    %c0_60 = arith.constant 0 : index
    %c0_61 = arith.constant 0 : index
    %241 = vector.load %arg3[%c0_60, %c0_61] : memref<8x256xf32, #tpu.memory_space<vmem>>, vector<8x256xf32>
    tpu.vector_store %arg3[%c0_60, %c0_61], %240 {strides = array<i32>} : memref<8x256xf32, #tpu.memory_space<vmem>>, vector<8x256xf32>,
    return
  }
  func.func @transform_0(%arg0: i32) -> (i32, i32) {
    %c0_i32 = arith.constant 0 : i32
    %c0_i32_0 = arith.constant 0 : i32
    return %arg0, %c0_i32 : i32, i32
  }
  func.func @transform_1(%arg0: i32) -> (i32, i32) {
    %c0_i32 = arith.constant 0 : i32
    %c0_i32_0 = arith.constant 0 : i32
    return %arg0, %c0_i32 : i32, i32
  }
  func.func @transform_2(%arg0: i32) -> (i32, i32) {
    %c0_i32 = arith.constant 0 : i32
    %c0_i32_0 = arith.constant 0 : i32
    return %arg0, %c0_i32 : i32, i32
  }
}

</mosaic_0001>

<llo_original>
// kernel: tpu_custom_call.1
$region0: #{tpu_custom_call.1}
  #allocation0 [shape = 'u32[]', space=smem, size = 0x4, offset = 0x4, fixed_abs, tag = 'smem constant byte address 0x4 - core index']
  #allocation1 [shape = 'u32[72,128]{1,0:T(1,128)}', space=vmem, size = 0x9000, scoped, tag = 'internal scratch']
  %s0 = inlined_call_operand.hbm [shape: f32[8,256], index: 0, kind: input, shape index: {}]
  %s1 = inlined_call_operand.hbm [shape: f32[8,14], index: 1, kind: input, shape index: {}]
  %s2 = inlined_call_operand.hbm [shape: f32[8,256], index: 2, kind: output, shape index: {}]
  %s3 = sld [smem:[#allocation0]]
  $region26: #{tpu_custom_call.1} parent=0
    _
  %s5 = ssub.s32 1, %s3
  %s6 = scalar_select 0, %s5, %s3
  $region1: #{tpu_custom_call.1} parent=0
    #allocation2 [shape = 'u8[8192]{0}', space=vmem, size = 0x2000, scoped, tag = 'input window, operand 0, single buffered']
    #allocation3 [shape = 's32[1]{0}', space=sflag, size = 0x4, scoped, tag = 'scoped memory for tpu_custom_call.1']
    #allocation4 [shape = 's32[1]{0}', space=sflag, size = 0x4, scoped, tag = 'scoped memory for tpu_custom_call.1']
    #allocation5 [shape = 'u8[4096]{0}', space=vmem, size = 0x1000, scoped, tag = 'input window, operand 1, single buffered']
    #allocation6 [shape = 's32[1]{0}', space=sflag, size = 0x4, scoped, tag = 'scoped memory for tpu_custom_call.1']
    #allocation7 [shape = 'u8[8192]{0}', space=vmem, size = 0x2000, scoped, tag = 'output window, operand 0, single buffered']
    %7 = vsyncpa [#allocation3], 0
    %8 = vsyncpa [#allocation6], 0
    %9 = vsyncpa [#allocation4], 0
    // Predicated region
    $region2: #{tpu_custom_call.1} parent=1 // pred_check
      _
    $region3: #{tpu_custom_call.1} parent=1 // pred_check_branch
      %11 = sbr.rel (0) target = $region5
    $region4: #{tpu_custom_call.1} parent=1 // pred_region
      %13 = vsyncadd [#allocation3], 0
      %s15 = sshll.u32 %s0, 4
      %s16 = int_to_ptr.hbm [resolvable:$true] %s15
      %s17 = sshll.u32 [#allocation2], 4
      %s18 = int_to_ptr.vmem [resolvable:$true] %s17
      %20 = dma.hbm_to_vmem [thread:$0]  %s16, 256, %s18, [#allocation3]
    $region5: #{tpu_custom_call.1} parent=1 // pred_fallthru
      _
    // Predicated region
    $region6: #{tpu_custom_call.1} parent=1 // pred_check
      _
    $region7: #{tpu_custom_call.1} parent=1 // pred_check_branch
      %22 = sbr.rel (0) target = $region9
    $region8: #{tpu_custom_call.1} parent=1 // pred_region
      %24 = vsyncadd [#allocation6], 0
      %s26 = sshll.u32 %s1, 4
      %s27 = int_to_ptr.hbm [resolvable:$true] %s26
      %s28 = sshll.u32 [#allocation5], 4
      %s29 = int_to_ptr.vmem [resolvable:$true] %s28
      %31 = dma.hbm_to_vmem [thread:$0]  %s27, 128, %s29, [#allocation6]
    $region9: #{tpu_custom_call.1} parent=1 // pred_fallthru
      _
    // Predicated region
    $region10: #{tpu_custom_call.1} parent=1 // pred_check
      _
    $region11: #{tpu_custom_call.1} parent=1 // pred_check_branch
      %33 = sbr.rel (0) target = $region13
    $region12: #{tpu_custom_call.1} parent=1 // pred_region
      %35 = dma.done [#allocation3], 256
    $region13: #{tpu_custom_call.1} parent=1 // pred_fallthru
      _
    // Predicated region
    $region14: #{tpu_custom_call.1} parent=1 // pred_check
      _
    $region15: #{tpu_custom_call.1} parent=1 // pred_check_branch
      %37 = sbr.rel (0) target = $region17
    $region16: #{tpu_custom_call.1} parent=1 // pred_region
      %39 = dma.done [#allocation6], 128
    $region17: #{tpu_custom_call.1} parent=1 // pred_fallthru
      _
    %v40 = vld [vmem:[#allocation2] sm:$0xff]
    %v41 = vld [vmem:[#allocation2 + $0x8] sm:$0xff]
    %v42 = vld [vmem:[#allocation5] sm:$0xff]
    %44 = vset.pattern.permute.xlu0 0
    %45 = vperm.xlu0 %44, %v42
    %v46 = vpop.permute.xlu0 %45
    %v48 = vmul.f32 %v40, %v46
    %v49 = vmul.f32 %v41, %v46
    %v50 = vlaneseq
    %v51 = vand.u32 %v50, 127
    %v52 = vadd.s32 %v51, 128
    %vm53 = vcmp.lt.s32.totalorder %v51, 0
    %v54 = vsub.s32 0, %v51
    %v55 = vsel %vm53, %v54, %v51
    %v56 = vshrl.u32 %v55, 4
    %v57 = vand.u32 %v55, 15
    %v58 = vsub.s32 0, %v57
    %v59 = vsel %vm53, %v58, %v57
    %vm60 = vcmp.lt.s32.totalorder %v52, 0
    %v61 = vsub.s32 0, %v52
    %v62 = vsel %vm60, %v61, %v52
    %v63 = vshrl.u32 %v62, 4
    %v64 = vand.u32 %v62, 15
    %v65 = vsub.s32 0, %v64
    %v66 = vsel %vm60, %v65, %v64
    %vm67 = vcmp.ne.s32.totalorder %v59, 0
    %vm68 = vcmp.ne.s32.totalorder %v66, 0
    %vm69 = vcmp.lt.s32.totalorder %v59, 0
    %vm70 = vcmp.lt.s32.totalorder %v66, 0
    %vm71 = vmand %vm69, %vm67
    %vm72 = vmand %vm70, %vm68
    %v73 = vadd.s32 %v59, 16
    %v74 = vadd.s32 %v66, 16
    %v75 = vsel %vm71, %v73, %v59
    %v76 = vsel %vm72, %v74, %v66
    %77 = vrot.lane.b32.xlu0 %v40, 48
    %v78 = vpop.permute.xlu0 %77
    %79 = vrot.lane.b32.xlu0 %v41, 48
    %v80 = vpop.permute.xlu0 %79
    %vm81 = vcmp.lt.s32.totalorder %v51, 48
    %v82 = vsel %vm81, %v78, %v80
    %v83 = vsel %vm81, %v80, %v78
    %v84 = vadd.s32 %v51, 4294967248
    %v85 = vadd.s32 %v52, 4294967248
    %vm86 = vcmp.ge.s32.totalorder %v84, 0
    %vm87 = vcmp.ge.s32.totalorder %v85, 0
    %vm88 = vcmp.lt.s32.totalorder %v84, 256
    %vm89 = vcmp.lt.s32.totalorder %v85, 256
    %vm90 = vmand %vm86, %vm88
    %vm91 = vmand %vm87, %vm89
    %v92 = vsel %vm90, 1, 0
    %v93 = vsel %vm91, 1, 0
    %vm94 = vcmp.eq.s32.totalorder %v92, 1
    %vm95 = vcmp.eq.s32.totalorder %v93, 1
    %v96 = vsel %vm94, %v83, 0.0
    %v97 = vsel %vm95, %v82, 0.0
    %98 = vset.pattern.permute.xlu0 1
    %99 = vperm.xlu0 %98, %v42
    %v100 = vpop.permute.xlu0 %99
    %v102 = vmul.f32 %v96, %v100
    %v103 = vmul.f32 %v97, %v100
    %v104 = vadd.f32 %v48, %v102
    %v105 = vadd.f32 %v49, %v103
    %106 = vrot.lane.b32.xlu0 %v40, 32
    %v107 = vpop.permute.xlu0 %106
    %108 = vrot.lane.b32.xlu0 %v41, 32
    %v109 = vpop.permute.xlu0 %108
    %vm110 = vcmp.lt.s32.totalorder %v51, 32
    %v111 = vsel %vm110, %v107, %v109
    %v112 = vsel %vm110, %v109, %v107
    %v113 = vadd.s32 %v51, 4294967264
    %v114 = vadd.s32 %v52, 4294967264
    %vm115 = vcmp.ge.s32.totalorder %v113, 0
    %vm116 = vcmp.ge.s32.totalorder %v114, 0
    %vm117 = vcmp.lt.s32.totalorder %v113, 256
    %vm118 = vcmp.lt.s32.totalorder %v114, 256
    %vm119 = vmand %vm115, %vm117
    %vm120 = vmand %vm116, %vm118
    %v121 = vsel %vm119, 1, 0
    %v122 = vsel %vm120, 1, 0
    %vm123 = vcmp.eq.s32.totalorder %v121, 1
    %vm124 = vcmp.eq.s32.totalorder %v122, 1
    %v125 = vsel %vm123, %v112, 0.0
    %v126 = vsel %vm124, %v111, 0.0
    %127 = vset.pattern.permute.xlu0 2
    %128 = vperm.xlu0 %127, %v42
    %v129 = vpop.permute.xlu0 %128
    %v131 = vmul.f32 %v125, %v129
    %v132 = vmul.f32 %v126, %v129
    %v133 = vadd.f32 %v104, %v131
    %v134 = vadd.f32 %v105, %v132
    %135 = vrot.lane.b32.xlu0 %v40, 16
    %v136 = vpop.permute.xlu0 %135
    %137 = vrot.lane.b32.xlu0 %v41, 16
    %v138 = vpop.permute.xlu0 %137
    %vm139 = vcmp.lt.s32.totalorder %v51, 16
    %v140 = vsel %vm139, %v136, %v138
    %v141 = vsel %vm139, %v138, %v136
    %v142 = vadd.s32 %v51, 4294967280
    %v143 = vadd.s32 %v52, 4294967280
    %vm144 = vcmp.ge.s32.totalorder %v142, 0
    %vm145 = vcmp.ge.s32.totalorder %v143, 0
    %vm146 = vcmp.lt.s32.totalorder %v142, 256
    %vm147 = vcmp.lt.s32.totalorder %v143, 256
    %vm148 = vmand %vm144, %vm146
    %vm149 = vmand %vm145, %vm147
    %v150 = vsel %vm148, 1, 0
    %v151 = vsel %vm149, 1, 0
    %vm152 = vcmp.eq.s32.totalorder %v150, 1
    %vm153 = vcmp.eq.s32.totalorder %v151, 1
    %v154 = vsel %vm152, %v141, 0.0
    %v155 = vsel %vm153, %v140, 0.0
    %156 = vset.pattern.permute.xlu0 3
    %157 = vperm.xlu0 %156, %v42
    %v158 = vpop.permute.xlu0 %157
    %v160 = vmul.f32 %v154, %v158
    %v161 = vmul.f32 %v155, %v158
    %v162 = vadd.f32 %v133, %v160
    %v163 = vadd.f32 %v134, %v161
    %164 = vrot.lane.b32.xlu0 %v40, 112
    %v165 = vpop.permute.xlu0 %164
    %166 = vrot.lane.b32.xlu0 %v41, 112
    %v167 = vpop.permute.xlu0 %166
    %vm168 = vcmp.lt.s32.totalorder %v51, 112
    %v169 = vsel %vm168, %v165, %v167
    %v170 = vsel %vm168, %v167, %v165
    %v171 = vadd.s32 %v51, 16
    %v172 = vadd.s32 %v52, 16
    %vm173 = vcmp.ge.s32.totalorder %v171, 0
    %vm174 = vcmp.ge.s32.totalorder %v172, 0
    %vm175 = vcmp.lt.s32.totalorder %v171, 256
    %vm176 = vcmp.lt.s32.totalorder %v172, 256
    %vm177 = vmand %vm173, %vm175
    %vm178 = vmand %vm174, %vm176
    %v179 = vsel %vm177, 1, 0
    %v180 = vsel %vm178, 1, 0
    %vm181 = vcmp.eq.s32.totalorder %v179, 1
    %vm182 = vcmp.eq.s32.totalorder %v180, 1
    %v183 = vsel %vm181, %v169, 0.0
    %v184 = vsel %vm182, %v170, 0.0
    %185 = vset.pattern.permute.xlu0 4
    %186 = vperm.xlu0 %185, %v42
    %v187 = vpop.permute.xlu0 %186
    %v189 = vmul.f32 %v183, %v187
    %v190 = vmul.f32 %v184, %v187
    %v191 = vadd.f32 %v162, %v189
    %v192 = vadd.f32 %v163, %v190
    %193 = vrot.lane.b32.xlu0 %v40, 96
    %v194 = vpop.permute.xlu0 %193
    %195 = vrot.lane.b32.xlu0 %v41, 96
    %v196 = vpop.permute.xlu0 %195
    %vm197 = vcmp.lt.s32.totalorder %v51, 96
    %v198 = vsel %vm197, %v194, %v196
    %v199 = vsel %vm197, %v196, %v194
    %v200 = vadd.s32 %v51, 32
    %v201 = vadd.s32 %v52, 32
    %vm202 = vcmp.ge.s32.totalorder %v200, 0
    %vm203 = vcmp.ge.s32.totalorder %v201, 0
    %vm204 = vcmp.lt.s32.totalorder %v200, 256
    %vm205 = vcmp.lt.s32.totalorder %v201, 256
    %vm206 = vmand %vm202, %vm204
    %vm207 = vmand %vm203, %vm205
    %v208 = vsel %vm206, 1, 0
    %v209 = vsel %vm207, 1, 0
    %vm210 = vcmp.eq.s32.totalorder %v208, 1
    %vm211 = vcmp.eq.s32.totalorder %v209, 1
    %v212 = vsel %vm210, %v198, 0.0
    %v213 = vsel %vm211, %v199, 0.0
    %214 = vset.pattern.permute.xlu0 5
    %215 = vperm.xlu0 %214, %v42
    %v216 = vpop.permute.xlu0 %215
    %v218 = vmul.f32 %v212, %v216
    %v219 = vmul.f32 %v213, %v216
    %v220 = vadd.f32 %v191, %v218
    %v221 = vadd.f32 %v192, %v219
    %222 = vrot.lane.b32.xlu0 %v40, 80
    %v223 = vpop.permute.xlu0 %222
    %224 = vrot.lane.b32.xlu0 %v41, 80
    %v225 = vpop.permute.xlu0 %224
    %vm226 = vcmp.lt.s32.totalorder %v51, 80
    %v227 = vsel %vm226, %v223, %v225
    %v228 = vsel %vm226, %v225, %v223
    %v229 = vadd.s32 %v51, 48
    %v230 = vadd.s32 %v52, 48
    %vm231 = vcmp.ge.s32.totalorder %v229, 0
    %vm232 = vcmp.ge.s32.totalorder %v230, 0
    %vm233 = vcmp.lt.s32.totalorder %v229, 256
    %vm234 = vcmp.lt.s32.totalorder %v230, 256
    %vm235 = vmand %vm231, %vm233
    %vm236 = vmand %vm232, %vm234
    %v237 = vsel %vm235, 1, 0
    %v238 = vsel %vm236, 1, 0
    %vm239 = vcmp.eq.s32.totalorder %v237, 1
    %vm240 = vcmp.eq.s32.totalorder %v238, 1
    %v241 = vsel %vm239, %v227, 0.0
    %v242 = vsel %vm240, %v228, 0.0
    %243 = vset.pattern.permute.xlu0 6
    %244 = vperm.xlu0 %243, %v42
    %v245 = vpop.permute.xlu0 %244
    %v247 = vmul.f32 %v241, %v245
    %v248 = vmul.f32 %v242, %v245
    %v249 = vadd.f32 %v220, %v247
    %v250 = vadd.f32 %v221, %v248
    %251 = vrot.lane.b32.xlu0 %v40, 3
    %v252 = vpop.permute.xlu0 %251
    %253 = vrot.lane.b32.xlu0 %v41, 3
    %v254 = vpop.permute.xlu0 %253
    %vm255 = vcmp.lt.s32.totalorder %v51, 3
    %v256 = vsel %vm255, %v252, %v254
    %v257 = vsel %vm255, %v254, %v252
    %v258 = vadd.s32 %v75, 4294967293
    %v259 = vadd.s32 %v76, 4294967293
    %vm260 = vcmp.ge.s32.totalorder %v258, 0
    %vm261 = vcmp.ge.s32.totalorder %v259, 0
    %vm262 = vcmp.lt.s32.totalorder %v258, 16
    %vm263 = vcmp.lt.s32.totalorder %v259, 16
    %vm264 = vmand %vm260, %vm262
    %vm265 = vmand %vm261, %vm263
    %v266 = vsel %vm264, 1, 0
    %v267 = vsel %vm265, 1, 0
    %vm268 = vcmp.eq.s32.totalorder %v266, 1
    %vm269 = vcmp.eq.s32.totalorder %v267, 1
    %v270 = vsel %vm268, %v257, 0.0
    %v271 = vsel %vm269, %v256, 0.0
    %272 = vset.pattern.permute.xlu0 7
    %273 = vperm.xlu0 %272, %v42
    %v274 = vpop.permute.xlu0 %273
    %v276 = vmul.f32 %v270, %v274
    %v277 = vmul.f32 %v271, %v274
    %v278 = vadd.f32 %v249, %v276
    %v279 = vadd.f32 %v250, %v277
    %280 = vrot.lane.b32.xlu0 %v40, 2
    %v281 = vpop.permute.xlu0 %280
    %282 = vrot.lane.b32.xlu0 %v41, 2
    %v283 = vpop.permute.xlu0 %282
    %vm284 = vcmp.lt.s32.totalorder %v51, 2
    %v285 = vsel %vm284, %v281, %v283
    %v286 = vsel %vm284, %v283, %v281
    %v287 = vadd.s32 %v75, 4294967294
    %v288 = vadd.s32 %v76, 4294967294
    %vm289 = vcmp.ge.s32.totalorder %v287, 0
    %vm290 = vcmp.ge.s32.totalorder %v288, 0
    %vm291 = vcmp.lt.s32.totalorder %v287, 16
    %vm292 = vcmp.lt.s32.totalorder %v288, 16
    %vm293 = vmand %vm289, %vm291
    %vm294 = vmand %vm290, %vm292
    %v295 = vsel %vm293, 1, 0
    %v296 = vsel %vm294, 1, 0
    %vm297 = vcmp.eq.s32.totalorder %v295, 1
    %vm298 = vcmp.eq.s32.totalorder %v296, 1
    %v299 = vsel %vm297, %v286, 0.0
    %v300 = vsel %vm298, %v285, 0.0
    %301 = vset.pattern.permute.xlu0 8
    %302 = vperm.xlu0 %301, %v42
    %v303 = vpop.permute.xlu0 %302
    %v305 = vmul.f32 %v299, %v303
    %v306 = vmul.f32 %v300, %v303
    %v307 = vadd.f32 %v278, %v305
    %v308 = vadd.f32 %v279, %v306
    %309 = vrot.lane.b32.xlu0 %v40, 1
    %v310 = vpop.permute.xlu0 %309
    %311 = vrot.lane.b32.xlu0 %v41, 1
    %v312 = vpop.permute.xlu0 %311
    %vm313 = vcmp.lt.s32.totalorder %v51, 1
    %v314 = vsel %vm313, %v310, %v312
    %v315 = vsel %vm313, %v312, %v310
    %v316 = vadd.s32 %v75, 4294967295
    %v317 = vadd.s32 %v76, 4294967295
    %vm318 = vcmp.ge.s32.totalorder %v316, 0
    %vm319 = vcmp.ge.s32.totalorder %v317, 0
    %vm320 = vcmp.lt.s32.totalorder %v316, 16
    %vm321 = vcmp.lt.s32.totalorder %v317, 16
    %vm322 = vmand %vm318, %vm320
    %vm323 = vmand %vm319, %vm321
    %v324 = vsel %vm322, 1, 0
    %v325 = vsel %vm323, 1, 0
    %vm326 = vcmp.eq.s32.totalorder %v324, 1
    %vm327 = vcmp.eq.s32.totalorder %v325, 1
    %v328 = vsel %vm326, %v315, 0.0
    %v329 = vsel %vm327, %v314, 0.0
    %330 = vset.pattern.permute.xlu0 9
    %331 = vperm.xlu0 %330, %v42
    %v332 = vpop.permute.xlu0 %331
    %v334 = vmul.f32 %v328, %v332
    %v335 = vmul.f32 %v329, %v332
    %v336 = vadd.f32 %v307, %v334
    %v337 = vadd.f32 %v308, %v335
    %338 = vrot.lane.b32.xlu0 %v40, 127
    %v339 = vpop.permute.xlu0 %338
    %340 = vrot.lane.b32.xlu0 %v41, 127
    %v341 = vpop.permute.xlu0 %340
    %vm342 = vcmp.lt.s32.totalorder %v51, 127
    %v343 = vsel %vm342, %v339, %v341
    %v344 = vsel %vm342, %v341, %v339
    %v345 = vadd.s32 %v75, 1
    %v346 = vadd.s32 %v76, 1
    %vm347 = vcmp.ge.s32.totalorder %v345, 0
    %vm348 = vcmp.ge.s32.totalorder %v346, 0
    %vm349 = vcmp.lt.s32.totalorder %v345, 16
    %vm350 = vcmp.lt.s32.totalorder %v346, 16
    %vm351 = vmand %vm347, %vm349
    %vm352 = vmand %vm348, %vm350
    %v353 = vsel %vm351, 1, 0
    %v354 = vsel %vm352, 1, 0
    %vm355 = vcmp.eq.s32.totalorder %v353, 1
    %vm356 = vcmp.eq.s32.totalorder %v354, 1
    %v357 = vsel %vm355, %v343, 0.0
    %v358 = vsel %vm356, %v344, 0.0
    %359 = vset.pattern.permute.xlu0 10
    %360 = vperm.xlu0 %359, %v42
    %v361 = vpop.permute.xlu0 %360
    %v363 = vmul.f32 %v357, %v361
    %v364 = vmul.f32 %v358, %v361
    %v365 = vadd.f32 %v336, %v363
    %v366 = vadd.f32 %v337, %v364
    %367 = vrot.lane.b32.xlu0 %v40, 126
    %v368 = vpop.permute.xlu0 %367
    %369 = vrot.lane.b32.xlu0 %v41, 126
    %v370 = vpop.permute.xlu0 %369
    %vm371 = vcmp.lt.s32.totalorder %v51, 126
    %v372 = vsel %vm371, %v368, %v370
    %v373 = vsel %vm371, %v370, %v368
    %v374 = vadd.s32 %v75, 2
    %v375 = vadd.s32 %v76, 2
    %vm376 = vcmp.ge.s32.totalorder %v374, 0
    %vm377 = vcmp.ge.s32.totalorder %v375, 0
    %vm378 = vcmp.lt.s32.totalorder %v374, 16
    %vm379 = vcmp.lt.s32.totalorder %v375, 16
    %vm380 = vmand %vm376, %vm378
    %vm381 = vmand %vm377, %vm379
    %v382 = vsel %vm380, 1, 0
    %v383 = vsel %vm381, 1, 0
    %vm384 = vcmp.eq.s32.totalorder %v382, 1
    %vm385 = vcmp.eq.s32.totalorder %v383, 1
    %v386 = vsel %vm384, %v372, 0.0
    %v387 = vsel %vm385, %v373, 0.0
    %388 = vset.pattern.permute.xlu0 11
    %389 = vperm.xlu0 %388, %v42
    %v390 = vpop.permute.xlu0 %389
    %v392 = vmul.f32 %v386, %v390
    %v393 = vmul.f32 %v387, %v390
    %v394 = vadd.f32 %v365, %v392
    %v395 = vadd.f32 %v366, %v393
    %396 = vrot.lane.b32.xlu0 %v40, 125
    %v397 = vpop.permute.xlu0 %396
    %398 = vrot.lane.b32.xlu0 %v41, 125
    %v399 = vpop.permute.xlu0 %398
    %vm400 = vcmp.lt.s32.totalorder %v51, 125
    %v401 = vsel %vm400, %v397, %v399
    %v402 = vsel %vm400, %v399, %v397
    %v403 = vadd.s32 %v75, 3
    %v404 = vadd.s32 %v76, 3
    %vm405 = vcmp.ge.s32.totalorder %v403, 0
    %vm406 = vcmp.ge.s32.totalorder %v404, 0
    %vm407 = vcmp.lt.s32.totalorder %v403, 16
    %vm408 = vcmp.lt.s32.totalorder %v404, 16
    %vm409 = vmand %vm405, %vm407
    %vm410 = vmand %vm406, %vm408
    %v411 = vsel %vm409, 1, 0
    %v412 = vsel %vm410, 1, 0
    %vm413 = vcmp.eq.s32.totalorder %v411, 1
    %vm414 = vcmp.eq.s32.totalorder %v412, 1
    %v415 = vsel %vm413, %v401, 0.0
    %v416 = vsel %vm414, %v402, 0.0
    %417 = vset.pattern.permute.xlu0 12
    %418 = vperm.xlu0 %417, %v42
    %v419 = vpop.permute.xlu0 %418
    %v421 = vmul.f32 %v415, %v419
    %v422 = vmul.f32 %v416, %v419
    %v423 = vadd.f32 %v394, %v421
    %v424 = vadd.f32 %v395, %v422
    %425 = vset.pattern.permute.xlu0 13
    %426 = vperm.xlu0 %425, %v42
    %v427 = vpop.permute.xlu0 %426
    %v429 = vadd.f32 %v423, %v427
    %v430 = vadd.f32 %v424, %v427
    %431 = vst [vmem:[#allocation7] sm:$0xff] %v429
    %432 = vst [vmem:[#allocation7 + $0x8] sm:$0xff] %v430
    // Predicated region
    $region18: #{tpu_custom_call.1} parent=1 // pred_check
      _
    $region19: #{tpu_custom_call.1} parent=1 // pred_check_branch
      %434 = sbr.rel (0) target = $region21
    $region20: #{tpu_custom_call.1} parent=1 // pred_region
      %436 = vsyncadd [#allocation4], 0
      %s438 = sshll.u32 [#allocation7], 4
      %s439 = int_to_ptr.vmem [resolvable:$true] %s438
      %s440 = sshll.u32 %s2, 4
      %s441 = int_to_ptr.hbm [resolvable:$true] %s440
      %443 = dma.vmem_to_hbm [thread:$0]  %s439, 256, %s441, [#allocation4]
    $region21: #{tpu_custom_call.1} parent=1 // pred_fallthru
      _
    // Predicated region
    $region22: #{tpu_custom_call.1} parent=1 // pred_check
      _
    $region23: #{tpu_custom_call.1} parent=1 // pred_check_branch
      %445 = sbr.rel (0) target = $region25
    $region24: #{tpu_custom_call.1} parent=1 // pred_region
      %447 = dma.done [#allocation4], 256
    $region25: #{tpu_custom_call.1} parent=1 // pred_fallthru
      _
    %448 = vsyncpa [#allocation3], 1
    %449 = vsyncpa [#allocation6], 1
    %450 = vsyncpa [#allocation4], 1

</llo_original>
